<compile_context>
chip_gen: v5e
topology: v5e:2x2
jax: 0.10.0
libtpu: 0.0.40
codegen_flags: <defaults>
</compile_context>

<pallas_src>
import functools

import jax
import jax.numpy as jnp
from jax import lax
from jax.experimental import pallas as pl
from jax.experimental.pallas import tpu as pltpu


_NEG_BIG = -1e30  # finite "-inf" for padded vocab columns (avoids -inf - -inf = NaN)


def _round_up(x, m):
    return ((x + m - 1) // m) * m


def _clmbr_kernel(feat_ref, w_ref, b_ref, labels_ref, *rest, tv, store_logits):
    """Grid step (i, j): row tile i x vocab tile j.

    Computes a (tm, tv) logits tile (optionally stored) and updates an online
    logsumexp + gathered-label-logit carried in VMEM scratch across j.
    At the last vocab tile it writes the per-row (masked) CE loss.
    """
    if store_logits:
        logits_ref, loss_ref, m_sc, l_sc, lab_sc = rest
    else:
        loss_ref, m_sc, l_sc, lab_sc = rest
        logits_ref = None

    j = pl.program_id(1)

    @pl.when(j == 0)
    def _():
        m_sc[...] = jnp.full(m_sc.shape, -jnp.inf, m_sc.dtype)
        l_sc[...] = jnp.zeros(l_sc.shape, l_sc.dtype)
        lab_sc[...] = jnp.zeros(lab_sc.shape, lab_sc.dtype)

    feats = feat_ref[...]                               # (tm, H)  compute dtype (bf16/f32)
    w = w_ref[...]                                      # (H, tv)  compute dtype
    bias = b_ref[...].astype(jnp.float32)               # (1, tv)  f32 (padded cols = -1e30)

    # MXU matmul with f32 accumulator; all CE epilogue math in f32.
    logits = jnp.dot(feats, w, preferred_element_type=jnp.float32) + bias   # (tm, tv) f32
    if store_logits:
        logits_ref[...] = logits.astype(logits_ref.dtype)

    labels = labels_ref[...]                            # (tm, 1) int32
    local_labels = labels - j * tv                      # shift labels instead of shifting iota

    # Online logsumexp across vocab tiles.
    tile_max = jnp.max(logits, axis=-1, keepdims=True)                      # (tm, 1)
    m_new = jnp.maximum(m_sc[...], tile_max)                                # (tm, 1)
    p = jnp.exp(logits - m_new)                                             # (tm, tv)
    l_sc[...] = l_sc[...] * jnp.exp(m_sc[...] - m_new) + jnp.sum(
        p, axis=-1, keepdims=True)
    m_sc[...] = m_new

    # Gather the label logit via a one-hot select against a static iota.
    col = lax.broadcasted_iota(jnp.int32, logits.shape, 1)                  # (tm, tv), static
    lab_sc[...] += jnp.sum(jnp.where(col == local_labels, logits, 0.0),
                           axis=-1, keepdims=True)

    @pl.when(j == pl.num_programs(1) - 1)
    def _():
        lse = m_sc[...] + jnp.log(l_sc[...])                                # (tm, 1)
        valid = labels >= 0                                                 # ignore_index / padding
        loss_ref[...] = jnp.where(valid, lse - lab_sc[...], 0.0).astype(loss_ref.dtype)


def _select_tiles(N, H, V, in_bytes, out_bytes, store_logits,
                  tm_target, tv_target, vmem_budget):
    """Pick (tm, tv) tiles under an explicit double-buffered VMEM budget."""
    # Vocab tile: lane-dense multiple of 128 (256-multiples preferred for the 256-wide
    # MXU on v6e/v7x); chosen so padding V up to a multiple of tv stays small (<=12.5%).
    candidates = [c for c in (2048, 1024, 512, 256, 128) if c <= max(int(tv_target), 128)]
    if not candidates:
        candidates = [128]
    tv = candidates[-1]
    for c in candidates:
        pad = _round_up(V, c) - V
        if pad == 0 or pad * 8 <= V:
            tv = c
            break

    # Row tile: as large as allowed (amortizes the (H, tv) weight stream), clamped for small N.
    tm = min(int(tm_target), _round_up(max(N, 1), 128))
    tm = max(tm, 128)

    def vmem_bytes(tm_, tv_):
        b = 2 * tm_ * H * in_bytes           # features  (double-buffered)
        b += 2 * H * tv_ * in_bytes          # weight
        b += 2 * tv_ * 4                     # bias (f32)
        b += 2 * tm_ * 4                     # labels (i32)
        if store_logits:
            b += 2 * tm_ * tv_ * out_bytes   # logits writeback tile
        b += 2 * tm_ * 4                     # per-row loss
        b += 3 * tm_ * 4                     # scratch (m, l, label logit)
        return b

    while vmem_bytes(tm, tv) > vmem_budget and tv > 512:
        tv //= 2
    while vmem_bytes(tm, tv) > vmem_budget and tm > 128:
        tm //= 2
    return tm, tv, vmem_bytes(tm, tv)


def clmbr_task_head(features, weight_t, bias, labels, *,
                    return_logits=True,
                    matmul_dtype=jnp.bfloat16,
                    tm=512, tv=2048,
                    vmem_budget=40 << 20):
    """features: (N, H); weight_t: (H, V) (pre-transposed nn.Linear weight); bias: (V,);
    labels: (N,) int (ignore_index=-100 supported).

    Returns (loss: scalar f32, logits: (N, V) in features.dtype, or None if
    return_logits=False).
    """
    N, H = features.shape
    Hw, V = weight_t.shape
    assert Hw == H

    out_dtype = features.dtype
    comp_dtype = matmul_dtype if matmul_dtype is not None else features.dtype
    feats_c = features.astype(comp_dtype)
    w_c = weight_t.astype(comp_dtype)

    in_bytes = jnp.dtype(comp_dtype).itemsize
    out_bytes = jnp.dtype(out_dtype).itemsize
    tm, tv, vbytes = _select_tiles(N, H, V, in_bytes, out_bytes, return_logits,
                                   tm_target=tm, tv_target=tv, vmem_budget=vmem_budget)

    n_pad = _round_up(N, tm)
    v_pad = _round_up(V, tv)

    labels_i = labels.astype(jnp.int32)
    feats_p = feats_c
    labels_p = labels_i
    if n_pad != N:
        feats_p = jnp.pad(feats_c, ((0, n_pad - N), (0, 0)))
        labels_p = jnp.pad(labels_i, (0, n_pad - N), constant_values=-100)

    bias_f32 = bias.astype(jnp.float32)
    w_p = w_c
    bias_p = bias_f32
    if v_pad != V:
        # Pad vocab: zero weight columns + large-negative bias -> they vanish from the lse.
        w_p = jnp.pad(w_c, ((0, 0), (0, v_pad - V)))
        bias_p = jnp.pad(bias_f32, (0, v_pad - V), constant_values=_NEG_BIG)

    labels2d = labels_p.reshape(n_pad, 1)
    bias2d = bias_p.reshape(1, v_pad)

    grid = (n_pad // tm, v_pad // tv)
    kernel = functools.partial(_clmbr_kernel, tv=tv, store_logits=return_logits)

    out_shapes = []
    out_specs = []
    if return_logits:
        out_shapes.append(jax.ShapeDtypeStruct((n_pad, v_pad), out_dtype))
        out_specs.append(pl.BlockSpec((tm, tv), lambda i, j: (i, j)))    # lane-dense logits tile
    out_shapes.append(jax.ShapeDtypeStruct((n_pad, 1), jnp.float32))
    out_specs.append(pl.BlockSpec((tm, 1), lambda i, j: (i, 0)))         # resident over j

    vmem_limit = int(min(60 << 20, max(int(vbytes * 1.25) + (2 << 20), 16 << 20)))

    outs = pl.pallas_call(
        kernel,
        out_shape=tuple(out_shapes),
        grid_spec=pltpu.PrefetchScalarGridSpec(
            num_scalar_prefetch=0,
            grid=grid,
            in_specs=[
                pl.BlockSpec((tm, H), lambda i, j: (i, 0)),    # features row tile
                pl.BlockSpec((H, tv), lambda i, j: (0, j)),    # weight vocab tile
                pl.BlockSpec((1, tv), lambda i, j: (0, j)),    # bias vocab tile (f32)
                pl.BlockSpec((tm, 1), lambda i, j: (i, 0)),    # labels row tile
            ],
            out_specs=tuple(out_specs),
            scratch_shapes=[pltpu.VMEM((tm, 1), jnp.float32),  # running max
                            pltpu.VMEM((tm, 1), jnp.float32),  # running sum-exp
                            pltpu.VMEM((tm, 1), jnp.float32)], # gathered label logit
        ),
        compiler_params=pltpu.CompilerParams(
            dimension_semantics=("parallel", "arbitrary"),
            vmem_limit_bytes=vmem_limit),
    )(feats_p, w_p, bias2d, labels2d)

    if return_logits:
        logits_p, per_row_loss = outs
        logits = logits_p[:N, :V]
    else:
        per_row_loss = outs[0] if isinstance(outs, (list, tuple)) else outs
        logits = None

    n_valid = jnp.sum((labels_i >= 0).astype(jnp.float32))
    # Mean over non-ignored rows; n_valid == 0 gives NaN, matching torch F.cross_entropy(mean).
    loss = jnp.sum(per_row_loss[:N, 0]) / n_valid
    return loss, logits


if __name__ == "__main__":
    # Small, deterministic problem: batch=8, hidden=32, clmbr_vocab=128.
    N, H, V = 8, 32, 128
    key = jax.random.PRNGKey(0)
    k_feat, k_w, k_b, k_lab = jax.random.split(key, 4)

    features = jax.random.normal(k_feat, (N, H), dtype=jnp.float32)
    # nn.Linear(hidden_size, clmbr_vocab_size): weight (V, H), bias (V,).
    bound = 1.0 / (H ** 0.5)
    weight = jax.random.uniform(k_w, (V, H), jnp.float32, -bound, bound)
    bias = jax.random.uniform(k_b, (V,), jnp.float32, -bound, bound)
    labels = jax.random.randint(k_lab, (N,), 0, V, dtype=jnp.int32)

    weight_t = weight.T  # [H, V] layout for lane-dense logits

    # Pure-JAX reference (same math as torch F.cross_entropy, mean reduction).
    ref_logits = features @ weight_t + bias
    ref_lse = jax.scipy.special.logsumexp(ref_logits, axis=-1)
    ref_loss = jnp.mean(ref_lse - ref_logits[jnp.arange(N), labels])

    # 1) Strict f32 path.
    loss32, logits32 = clmbr_task_head(features, weight_t, bias, labels,
                                       matmul_dtype=jnp.float32)
    loss32 = jax.block_until_ready(loss32)
    logits32 = jax.block_until_ready(logits32)
    assert logits32.shape == (N, V)
    assert jnp.allclose(logits32, ref_logits, atol=1e-4, rtol=1e-4)
    assert jnp.allclose(loss32, ref_loss, atol=1e-4, rtol=1e-4)

    # 2) Default (bf16 matmul operands) path; f32 accumulation -> loose tolerance vs f32 ref.
    loss16, logits16 = clmbr_task_head(features, weight_t, bias, labels)
    loss16 = jax.block_until_ready(loss16)
    assert jnp.allclose(logits16.astype(jnp.float32), ref_logits, atol=6e-2, rtol=6e-2)
    assert jnp.allclose(loss16, ref_loss, atol=5e-2, rtol=5e-2)

    # 3) Loss-only path (no logits writeback).
    loss_only, no_logits = clmbr_task_head(features, weight_t, bias, labels,
                                           return_logits=False,
                                           matmul_dtype=jnp.float32)
    loss_only = jax.block_until_ready(loss_only)
    assert no_logits is None
    assert jnp.allclose(loss_only, ref_loss, atol=1e-4, rtol=1e-4)

    print("KERNEL_OK")
</pallas_src>

<mosaic_0001>
module attributes {stable_mosaic.version = 11 : i64} {
  func.func @_clmbr_kernel(%arg0: i32, %arg1: i32, %arg2: memref<128x32xf32, #tpu.memory_space<vmem>>, %arg3: memref<32x128xf32, #tpu.memory_space<vmem>>, %arg4: memref<1x128xf32, #tpu.memory_space<vmem>>, %arg5: memref<128x1xi32, #tpu.memory_space<vmem>>, %arg6: memref<128x128xf32, #tpu.memory_space<vmem>>, %arg7: memref<128x1xf32, #tpu.memory_space<vmem>>, %arg8: memref<128x1xf32, #tpu.memory_space<vmem>>, %arg9: memref<128x1xf32, #tpu.memory_space<vmem>>, %arg10: memref<128x1xf32, #tpu.memory_space<vmem>>) attributes {dimension_semantics = [#tpu.dimension_semantics<parallel>, #tpu.dimension_semantics<arbitrary>], iteration_bounds = array<i64: 1, 1>, scalar_prefetch = 0 : i64, scratch_operands = 3 : i64, tpu.core_type = #tpu.core_type<tc>, window_params = [{transform_indices = @transform_0, window_bounds = array<i64: 128, 32>}, {transform_indices = @transform_1, window_bounds = array<i64: 32, 128>}, {transform_indices = @transform_2, window_bounds = array<i64: 1, 128>}, {transform_indices = @transform_3, window_bounds = array<i64: 128, 1>}, {transform_indices = @transform_4, window_bounds = array<i64: 128, 128>}, {transform_indices = @transform_5, window_bounds = array<i64: 128, 1>}]} {
    %c0_i32 = arith.constant 0 : i32
    %0 = arith.cmpi eq, %arg1, %c0_i32 : i32
    %1 = arith.extui %0 : i1 to i32
    %c0_i32_0 = arith.constant 0 : i32
    %2 = arith.cmpi ne, %1, %c0_i32_0 : i32
    scf.if %2 {
      %cst_30 = arith.constant 0xFF800000 : f32
      %44 = vector.broadcast %cst_30 : f32 to vector<128x1xf32>
      %c0_31 = arith.constant 0 : index
      %c0_32 = arith.constant 0 : index
      %45 = vector.load %arg8[%c0_31, %c0_32] : memref<128x1xf32, #tpu.memory_space<vmem>>, vector<128x1xf32>
      tpu.vector_store %arg8[%c0_31, %c0_32], %44 {strides = array<i32>} : memref<128x1xf32, #tpu.memory_space<vmem>>, vector<128x1xf32>,
      %cst_33 = arith.constant 0.000000e+00 : f32
      %46 = vector.broadcast %cst_33 : f32 to vector<128x1xf32>
      %c0_34 = arith.constant 0 : index
      %c0_35 = arith.constant 0 : index
      %47 = vector.load %arg9[%c0_34, %c0_35] : memref<128x1xf32, #tpu.memory_space<vmem>>, vector<128x1xf32>
      tpu.vector_store %arg9[%c0_34, %c0_35], %46 {strides = array<i32>} : memref<128x1xf32, #tpu.memory_space<vmem>>, vector<128x1xf32>,
      %cst_36 = arith.constant 0.000000e+00 : f32
      %48 = vector.broadcast %cst_36 : f32 to vector<128x1xf32>
      %c0_37 = arith.constant 0 : index
      %c0_38 = arith.constant 0 : index
      %49 = vector.load %arg10[%c0_37, %c0_38] : memref<128x1xf32, #tpu.memory_space<vmem>>, vector<128x1xf32>
      tpu.vector_store %arg10[%c0_37, %c0_38], %48 {strides = array<i32>} : memref<128x1xf32, #tpu.memory_space<vmem>>, vector<128x1xf32>,
    } else {
    }
    %c0 = arith.constant 0 : index
    %c0_1 = arith.constant 0 : index
    %3 = vector.load %arg2[%c0, %c0_1] : memref<128x32xf32, #tpu.memory_space<vmem>>, vector<128x32xf32>
    %c0_2 = arith.constant 0 : index
    %c0_3 = arith.constant 0 : index
    %4 = vector.load %arg3[%c0_2, %c0_3] : memref<32x128xf32, #tpu.memory_space<vmem>>, vector<32x128xf32>
    %c0_4 = arith.constant 0 : index
    %c0_5 = arith.constant 0 : index
    %5 = vector.load %arg4[%c0_4, %c0_5] : memref<1x128xf32, #tpu.memory_space<vmem>>, vector<1x128xf32>
    %cst = arith.constant dense<0.000000e+00> : vector<128x128xf32>
    %6 = tpu.matmul %3, %4, %cst {dimension_numbers = #tpu.dot_dimension_numbers<[1], [0], [0], [1], [0, 0, 1, 1], [], []>} : vector<128x32xf32>, vector<32x128xf32>, vector<128x128xf32> -> vector<128x128xf32>
    %7 = vector.broadcast %5 : vector<1x128xf32> to vector<128x128xf32>
    %8 = arith.addf %6, %7 : vector<128x128xf32>
    %c0_6 = arith.constant 0 : index
    %c0_7 = arith.constant 0 : index
    %9 = vector.load %arg6[%c0_6, %c0_7] : memref<128x128xf32, #tpu.memory_space<vmem>>, vector<128x128xf32>
    tpu.vector_store %arg6[%c0_6, %c0_7], %8 {strides = array<i32>} : memref<128x128xf32, #tpu.memory_space<vmem>>, vector<128x128xf32>,
    %c0_8 = arith.constant 0 : index
    %c0_9 = arith.constant 0 : index
    %10 = vector.load %arg5[%c0_8, %c0_9] : memref<128x1xi32, #tpu.memory_space<vmem>>, vector<128x1xi32>
    %c128_i32 = arith.constant 128 : i32
    %11 = arith.muli %arg1, %c128_i32 : i32
    %12 = vector.broadcast %11 : i32 to vector<128x1xi32>
    %13 = arith.subi %10, %12 : vector<128x1xi32>
    %cst_10 = arith.constant dense<0xFF800000> : vector<128xf32>
    %14 = vector.multi_reduction <maximumf>, %8, %cst_10 [1] : vector<128x128xf32> to vector<128xf32>
    %15 = vector.shape_cast %14 : vector<128xf32> to vector<128x1xf32>
    %c0_11 = arith.constant 0 : index
    %c0_12 = arith.constant 0 : index
    %16 = vector.load %arg8[%c0_11, %c0_12] : memref<128x1xf32, #tpu.memory_space<vmem>>, vector<128x1xf32>
    %17 = arith.maximumf %16, %15 : vector<128x1xf32>
    %18 = vector.broadcast %17 : vector<128x1xf32> to vector<128x128xf32>
    %19 = arith.subf %8, %18 : vector<128x128xf32>
    %20 = math.exp %19 : vector<128x128xf32>
    %c0_13 = arith.constant 0 : index
    %c0_14 = arith.constant 0 : index
    %21 = vector.load %arg9[%c0_13, %c0_14] : memref<128x1xf32, #tpu.memory_space<vmem>>, vector<128x1xf32>
    %c0_15 = arith.constant 0 : index
    %c0_16 = arith.constant 0 : index
    %22 = vector.load %arg8[%c0_15, %c0_16] : memref<128x1xf32, #tpu.memory_space<vmem>>, vector<128x1xf32>
    %23 = arith.subf %22, %17 : vector<128x1xf32>
    %24 = math.exp %23 : vector<128x1xf32>
    %25 = arith.mulf %21, %24 : vector<128x1xf32>
    %cst_17 = arith.constant dense<0.000000e+00> : vector<128xf32>
    %26 = vector.multi_reduction <add>, %20, %cst_17 [1] : vector<128x128xf32> to vector<128xf32>
    %27 = vector.shape_cast %26 : vector<128xf32> to vector<128x1xf32>
    %28 = arith.addf %25, %27 : vector<128x1xf32>
    %c0_18 = arith.constant 0 : index
    %c0_19 = arith.constant 0 : index
    %29 = vector.load %arg9[%c0_18, %c0_19] : memref<128x1xf32, #tpu.memory_space<vmem>>, vector<128x1xf32>
    tpu.vector_store %arg9[%c0_18, %c0_19], %28 {strides = array<i32>} : memref<128x1xf32, #tpu.memory_space<vmem>>, vector<128x1xf32>,
    %c0_20 = arith.constant 0 : index
    %c0_21 = arith.constant 0 : index
    %30 = vector.load %arg8[%c0_20, %c0_21] : memref<128x1xf32, #tpu.memory_space<vmem>>, vector<128x1xf32>
    tpu.vector_store %arg8[%c0_20, %c0_21], %17 {strides = array<i32>} : memref<128x1xf32, #tpu.memory_space<vmem>>, vector<128x1xf32>,
    %31 = tpu.iota {dimensions = array<i32: 1>} : vector<128x128xi32>
    %c0_22 = arith.constant 0 : index
    %c0_23 = arith.constant 0 : index
    %32 = vector.load %arg10[%c0_22, %c0_23] : memref<128x1xf32, #tpu.memory_space<vmem>>, vector<128x1xf32>
    %33 = vector.broadcast %13 : vector<128x1xi32> to vector<128x128xi32>
    %34 = arith.cmpi eq, %31, %33 : vector<128x128xi32>
    %cst_24 = arith.constant 0.000000e+00 : f32
    %35 = vector.broadcast %cst_24 : f32 to vector<128x128xf32>
    %36 = arith.select %34, %8, %35 : vector<128x128xi1>, vector<128x128xf32>
    %cst_25 = arith.constant dense<0.000000e+00> : vector<128xf32>
    %37 = vector.multi_reduction <add>, %36, %cst_25 [1] : vector<128x128xf32> to vector<128xf32>
    %38 = vector.shape_cast %37 : vector<128xf32> to vector<128x1xf32>
    %39 = arith.addf %32, %38 : vector<128x1xf32>
    %c0_26 = arith.constant 0 : index
    %c0_27 = arith.constant 0 : index
    %40 = vector.load %arg10[%c0_26, %c0_27] : memref<128x1xf32, #tpu.memory_space<vmem>>, vector<128x1xf32>
    tpu.vector_store %arg10[%c0_26, %c0_27], %39 {strides = array<i32>} : memref<128x1xf32, #tpu.memory_space<vmem>>, vector<128x1xf32>,
    %c0_i32_28 = arith.constant 0 : i32
    %41 = arith.cmpi eq, %arg1, %c0_i32_28 : i32
    %42 = arith.extui %41 : i1 to i32
    %c0_i32_29 = arith.constant 0 : i32
    %43 = arith.cmpi ne, %42, %c0_i32_29 : i32
    scf.if %43 {
      %c0_30 = arith.constant 0 : index
      %c0_31 = arith.constant 0 : index
      %44 = vector.load %arg8[%c0_30, %c0_31] : memref<128x1xf32, #tpu.memory_space<vmem>>, vector<128x1xf32>
      %c0_32 = arith.constant 0 : index
      %c0_33 = arith.constant 0 : index
      %45 = vector.load %arg9[%c0_32, %c0_33] : memref<128x1xf32, #tpu.memory_space<vmem>>, vector<128x1xf32>
      %46 = math.log %45 : vector<128x1xf32>
      %47 = arith.addf %44, %46 : vector<128x1xf32>
      %c0_i32_34 = arith.constant 0 : i32
      %48 = vector.broadcast %c0_i32_34 : i32 to vector<128x1xi32>
      %49 = arith.cmpi sge, %10, %48 : vector<128x1xi32>
      %c0_35 = arith.constant 0 : index
      %c0_36 = arith.constant 0 : index
      %50 = vector.load %arg10[%c0_35, %c0_36] : memref<128x1xf32, #tpu.memory_space<vmem>>, vector<128x1xf32>
      %51 = arith.subf %47, %50 : vector<128x1xf32>
      %cst_37 = arith.constant 0.000000e+00 : f32
      %52 = vector.broadcast %cst_37 : f32 to vector<128x1xf32>
      %53 = arith.select %49, %51, %52 : vector<128x1xi1>, vector<128x1xf32>
      %c0_38 = arith.constant 0 : index
      %c0_39 = arith.constant 0 : index
      %54 = vector.load %arg7[%c0_38, %c0_39] : memref<128x1xf32, #tpu.memory_space<vmem>>, vector<128x1xf32>
      tpu.vector_store %arg7[%c0_38, %c0_39], %53 {strides = array<i32>} : memref<128x1xf32, #tpu.memory_space<vmem>>, vector<128x1xf32>,
    } else {
    }
    return
  }
  func.func @transform_0(%arg0: i32, %arg1: i32) -> (i32, i32) {
    %c0_i32 = arith.constant 0 : i32
    %c0_i32_0 = arith.constant 0 : i32
    return %arg0, %c0_i32 : i32, i32
  }
  func.func @transform_1(%arg0: i32, %arg1: i32) -> (i32, i32) {
    %c0_i32 = arith.constant 0 : i32
    %c0_i32_0 = arith.constant 0 : i32
    return %c0_i32, %arg1 : i32, i32
  }
  func.func @transform_2(%arg0: i32, %arg1: i32) -> (i32, i32) {
    %c0_i32 = arith.constant 0 : i32
    %c0_i32_0 = arith.constant 0 : i32
    return %c0_i32, %arg1 : i32, i32
  }
  func.func @transform_3(%arg0: i32, %arg1: i32) -> (i32, i32) {
    %c0_i32 = arith.constant 0 : i32
    %c0_i32_0 = arith.constant 0 : i32
    return %arg0, %c0_i32 : i32, i32
  }
  func.func @transform_4(%arg0: i32, %arg1: i32) -> (i32, i32) {
    %c0_i32 = arith.constant 0 : i32
    return %arg0, %arg1 : i32, i32
  }
  func.func @transform_5(%arg0: i32, %arg1: i32) -> (i32, i32) {
    %c0_i32 = arith.constant 0 : i32
    %c0_i32_0 = arith.constant 0 : i32
    return %arg0, %c0_i32 : i32, i32
  }
}

</mosaic_0001>

<llo_original>
// kernel: tpu_custom_call.1
$region0: #{tpu_custom_call.1}
  #allocation0 [shape = 'u32[]', space=smem, size = 0x4, offset = 0x4, fixed_abs, tag = 'smem constant byte address 0x4 - core index']
  #allocation1 [shape = 'u32[72,128]{1,0:T(1,128)}', space=vmem, size = 0x9000, scoped, tag = 'internal scratch']
  #allocation2 [shape = 'f32[128,1]{1,0:T(8,128)}', space=vmem, size = 0x10000, scoped, tag = 'scratch operand']
  #allocation3 [shape = 'f32[128,1]{1,0:T(8,128)}', space=vmem, size = 0x10000, scoped, tag = 'scratch operand']
  #allocation4 [shape = 'f32[128,1]{1,0:T(8,128)}', space=vmem, size = 0x10000, scoped, tag = 'scratch operand']
  %s0 = inlined_call_operand.vmem [shape: f32[128,32], index: 0, kind: input, shape index: {}]
  %s1 = inlined_call_operand.vmem [shape: f32[32,128], index: 1, kind: input, shape index: {}]
  %s2 = inlined_call_operand.vmem [shape: f32[1,128], index: 2, kind: input, shape index: {}]
  %s3 = inlined_call_operand.vmem [shape: s32[128,1], index: 3, kind: input, shape index: {}]
  %s4 = inlined_call_operand.hbm [shape: f32[128,128], index: 4, kind: output, shape index: {0}]
  %s5 = inlined_call_operand.vmem [shape: f32[128,1], index: 5, kind: output, shape index: {1}]
  %6 = xla_tuple %s4, %s5
  %s7 = sld [smem:[#allocation0]]
  $region42: #{tpu_custom_call.1} parent=0
    _
  %s9 = ssub.s32 1, %s7
  %s10 = scalar_select 0, %s9, %s7
  $region1: #{tpu_custom_call.1} parent=0
    #allocation5 [shape = 'u8[65536]{0}', space=vmem, size = 0x10000, scoped, tag = 'output window, operand 0, single buffered']
    #allocation6 [shape = 's32[1]{0}', space=sflag, size = 0x4, scoped, tag = 'scoped memory for tpu_custom_call.1']
    %11 = vsyncpa [#allocation6], 0
    // Predicated region
    $region2: #{tpu_custom_call.1} parent=1 // pred_check
      _
    $region3: #{tpu_custom_call.1} parent=1 // pred_check_branch
      %13 = sbr.rel (0) target = $region5
    $region4: #{tpu_custom_call.1} parent=1 // pred_region
      _
    $region5: #{tpu_custom_call.1} parent=1 // pred_fallthru
      _
    // Predicated region
    $region6: #{tpu_custom_call.1} parent=1 // pred_check
      _
    $region7: #{tpu_custom_call.1} parent=1 // pred_check_branch
      %15 = sbr.rel (0) target = $region9
    $region8: #{tpu_custom_call.1} parent=1 // pred_region
      _
    $region9: #{tpu_custom_call.1} parent=1 // pred_fallthru
      _
    // Predicated region
    $region10: #{tpu_custom_call.1} parent=1 // pred_check
      _
    $region11: #{tpu_custom_call.1} parent=1 // pred_check_branch
      %17 = sbr.rel (0) target = $region13
    $region12: #{tpu_custom_call.1} parent=1 // pred_region
      _
    $region13: #{tpu_custom_call.1} parent=1 // pred_fallthru
      _
    // Predicated region
    $region14: #{tpu_custom_call.1} parent=1 // pred_check
      _
    $region15: #{tpu_custom_call.1} parent=1 // pred_check_branch
      %19 = sbr.rel (0) target = $region17
    $region16: #{tpu_custom_call.1} parent=1 // pred_region
      _
    $region17: #{tpu_custom_call.1} parent=1 // pred_fallthru
      _
    %p20 = scmp.eq.s32.totalorder 0, 0
    // Predicated region
    $region18: #{tpu_custom_call.1} parent=1 // pred_check
      %p21 = pneg %p20
    $region19: #{tpu_custom_call.1} parent=1 // pred_check_branch
      %23 = sbr.rel (%p21) target = $region21
    $region20: #{tpu_custom_call.1} parent=1 // pred_region
      %vm24 = vcmask 7168
      %25 = vst.msk [vmem:[#allocation2] sm:$0xff] %vm24, -inf
      %26 = vst.msk [vmem:[#allocation2 + $0x8] sm:$0xff] %vm24, -inf
      %27 = vst.msk [vmem:[#allocation2 + $0x10] sm:$0xff] %vm24, -inf
      %28 = vst.msk [vmem:[#allocation2 + $0x18] sm:$0xff] %vm24, -inf
      %29 = vst.msk [vmem:[#allocation2 + $0x20] sm:$0xff] %vm24, -inf
      %30 = vst.msk [vmem:[#allocation2 + $0x28] sm:$0xff] %vm24, -inf
      %31 = vst.msk [vmem:[#allocation2 + $0x30] sm:$0xff] %vm24, -inf
      %32 = vst.msk [vmem:[#allocation2 + $0x38] sm:$0xff] %vm24, -inf
      %33 = vst.msk [vmem:[#allocation2 + $0x40] sm:$0xff] %vm24, -inf
      %34 = vst.msk [vmem:[#allocation2 + $0x48] sm:$0xff] %vm24, -inf
      %35 = vst.msk [vmem:[#allocation2 + $0x50] sm:$0xff] %vm24, -inf
      %36 = vst.msk [vmem:[#allocation2 + $0x58] sm:$0xff] %vm24, -inf
      %37 = vst.msk [vmem:[#allocation2 + $0x60] sm:$0xff] %vm24, -inf
      %38 = vst.msk [vmem:[#allocation2 + $0x68] sm:$0xff] %vm24, -inf
      %39 = vst.msk [vmem:[#allocation2 + $0x70] sm:$0xff] %vm24, -inf
      %40 = vst.msk [vmem:[#allocation2 + $0x78] sm:$0xff] %vm24, -inf
      %41 = vst.msk [vmem:[#allocation3] sm:$0xff] %vm24, 0.0
      %42 = vst.msk [vmem:[#allocation3 + $0x8] sm:$0xff] %vm24, 0.0
      %43 = vst.msk [vmem:[#allocation3 + $0x10] sm:$0xff] %vm24, 0.0
      %44 = vst.msk [vmem:[#allocation3 + $0x18] sm:$0xff] %vm24, 0.0
      %45 = vst.msk [vmem:[#allocation3 + $0x20] sm:$0xff] %vm24, 0.0
      %46 = vst.msk [vmem:[#allocation3 + $0x28] sm:$0xff] %vm24, 0.0
      %47 = vst.msk [vmem:[#allocation3 + $0x30] sm:$0xff] %vm24, 0.0
      %48 = vst.msk [vmem:[#allocation3 + $0x38] sm:$0xff] %vm24, 0.0
      %49 = vst.msk [vmem:[#allocation3 + $0x40] sm:$0xff] %vm24, 0.0
      %50 = vst.msk [vmem:[#allocation3 + $0x48] sm:$0xff] %vm24, 0.0
      %51 = vst.msk [vmem:[#allocation3 + $0x50] sm:$0xff] %vm24, 0.0
      %52 = vst.msk [vmem:[#allocation3 + $0x58] sm:$0xff] %vm24, 0.0
      %53 = vst.msk [vmem:[#allocation3 + $0x60] sm:$0xff] %vm24, 0.0
      %54 = vst.msk [vmem:[#allocation3 + $0x68] sm:$0xff] %vm24, 0.0
      %55 = vst.msk [vmem:[#allocation3 + $0x70] sm:$0xff] %vm24, 0.0
      %56 = vst.msk [vmem:[#allocation3 + $0x78] sm:$0xff] %vm24, 0.0
      %57 = vst.msk [vmem:[#allocation4] sm:$0xff] %vm24, 0.0
      %58 = vst.msk [vmem:[#allocation4 + $0x8] sm:$0xff] %vm24, 0.0
      %59 = vst.msk [vmem:[#allocation4 + $0x10] sm:$0xff] %vm24, 0.0
      %60 = vst.msk [vmem:[#allocation4 + $0x18] sm:$0xff] %vm24, 0.0
      %61 = vst.msk [vmem:[#allocation4 + $0x20] sm:$0xff] %vm24, 0.0
      %62 = vst.msk [vmem:[#allocation4 + $0x28] sm:$0xff] %vm24, 0.0
      %63 = vst.msk [vmem:[#allocation4 + $0x30] sm:$0xff] %vm24, 0.0
      %64 = vst.msk [vmem:[#allocation4 + $0x38] sm:$0xff] %vm24, 0.0
      %65 = vst.msk [vmem:[#allocation4 + $0x40] sm:$0xff] %vm24, 0.0
      %66 = vst.msk [vmem:[#allocation4 + $0x48] sm:$0xff] %vm24, 0.0
      %67 = vst.msk [vmem:[#allocation4 + $0x50] sm:$0xff] %vm24, 0.0
      %68 = vst.msk [vmem:[#allocation4 + $0x58] sm:$0xff] %vm24, 0.0
      %69 = vst.msk [vmem:[#allocation4 + $0x60] sm:$0xff] %vm24, 0.0
      %70 = vst.msk [vmem:[#allocation4 + $0x68] sm:$0xff] %vm24, 0.0
      %71 = vst.msk [vmem:[#allocation4 + $0x70] sm:$0xff] %vm24, 0.0
      %72 = vst.msk [vmem:[#allocation4 + $0x78] sm:$0xff] %vm24, 0.0
    $region21: #{tpu_custom_call.1} parent=1 // pred_fallthru
      _
    %v73 = vld [vmem:[%s0] sm:$0xff]
    %v74 = vld [vmem:[%s0 + $0x8] sm:$0xff]
    %v75 = vld [vmem:[%s0 + $0x10] sm:$0xff]
    %v76 = vld [vmem:[%s0 + $0x18] sm:$0xff]
    %v77 = vld [vmem:[%s0 + $0x20] sm:$0xff]
    %v78 = vld [vmem:[%s0 + $0x28] sm:$0xff]
    %v79 = vld [vmem:[%s0 + $0x30] sm:$0xff]
    %v80 = vld [vmem:[%s0 + $0x38] sm:$0xff]
    %v81 = vld [vmem:[%s0 + $0x40] sm:$0xff]
    %v82 = vld [vmem:[%s0 + $0x48] sm:$0xff]
    %v83 = vld [vmem:[%s0 + $0x50] sm:$0xff]
    %v84 = vld [vmem:[%s0 + $0x58] sm:$0xff]
    %v85 = vld [vmem:[%s0 + $0x60] sm:$0xff]
    %v86 = vld [vmem:[%s0 + $0x68] sm:$0xff]
    %v87 = vld [vmem:[%s0 + $0x70] sm:$0xff]
    %v88 = vld [vmem:[%s0 + $0x78] sm:$0xff]
    %v89 = vld [vmem:[%s1] sm:$0xff]
    %v90 = vld [vmem:[%s1 + $0x8] sm:$0xff]
    %v91 = vld [vmem:[%s1 + $0x10] sm:$0xff]
    %v92 = vld [vmem:[%s1 + $0x18] sm:$0xff]
    %v93 = vld [vmem:[%s2] sm:$0x1]
    %v95 = vperm.slane %v93, 0
    %vm97 = vcmask 261120
    %v99 = vsel %vm97, %v73, 0
    %v102 = vsel %vm97, %v74, 0
    %v105 = vsel %vm97, %v75, 0
    %v108 = vsel %vm97, %v76, 0
    %v111 = vsel %vm97, %v77, 0
    %v114 = vsel %vm97, %v78, 0
    %v117 = vsel %vm97, %v79, 0
    %v120 = vsel %vm97, %v80, 0
    %v123 = vsel %vm97, %v81, 0
    %v126 = vsel %vm97, %v82, 0
    %v129 = vsel %vm97, %v83, 0
    %v132 = vsel %vm97, %v84, 0
    %v135 = vsel %vm97, %v85, 0
    %v138 = vsel %vm97, %v86, 0
    %v141 = vsel %vm97, %v87, 0
    %v144 = vsel %vm97, %v88, 0
    %146 = vmatpush.msra.mxu0 0.0
    %147 = vmatpush.msra.mxu0 0.0
    %148 = vmatpush.msra.mxu0 0.0
    %149 = vmatpush.msra.mxu0 0.0
    %150 = vmatpush.msra.mxu0 0.0
    %151 = vmatpush.msra.mxu0 0.0
    %152 = vmatpush.msra.mxu0 0.0
    %153 = vmatpush.msra.mxu0 0.0
    %154 = vmatpush.msra.mxu0 0.0
    %155 = vmatpush.msra.mxu0 0.0
    %156 = vmatpush.msra.mxu0 0.0
    %157 = vmatpush.msra.mxu0 0.0
    %158 = vmatpush.msra.mxu0 %v92
    %159 = vmatpush.msra.mxu0 %v91
    %160 = vmatpush.msra.mxu0 %v90
    %161 = vmatpush.msra.mxu0 %v89
    %162 = vmatmul.f32.gmra.mxu0 %v99
    %v163 = vpop.f32.mrf.mxu0
    %v164 = vadd.f32 %v95, %v163
    %165 = vmatmul.f32.gmra.mxu0 %v102
    %v166 = vpop.f32.mrf.mxu0
    %v167 = vadd.f32 %v95, %v166
    %168 = vmatmul.f32.gmra.mxu0 %v105
    %v169 = vpop.f32.mrf.mxu0
    %v170 = vadd.f32 %v95, %v169
    %171 = vmatmul.f32.gmra.mxu0 %v108
    %v172 = vpop.f32.mrf.mxu0
    %v173 = vadd.f32 %v95, %v172
    %174 = vmatmul.f32.gmra.mxu0 %v111
    %v175 = vpop.f32.mrf.mxu0
    %v176 = vadd.f32 %v95, %v175
    %177 = vmatmul.f32.gmra.mxu0 %v114
    %v178 = vpop.f32.mrf.mxu0
    %v179 = vadd.f32 %v95, %v178
    %180 = vmatmul.f32.gmra.mxu0 %v117
    %v181 = vpop.f32.mrf.mxu0
    %v182 = vadd.f32 %v95, %v181
    %183 = vmatmul.f32.gmra.mxu0 %v120
    %v184 = vpop.f32.mrf.mxu0
    %v185 = vadd.f32 %v95, %v184
    %186 = vmatmul.f32.gmra.mxu0 %v123
    %v187 = vpop.f32.mrf.mxu0
    %v188 = vadd.f32 %v95, %v187
    %189 = vmatmul.f32.gmra.mxu0 %v126
    %v190 = vpop.f32.mrf.mxu0
    %v191 = vadd.f32 %v95, %v190
    %192 = vmatmul.f32.gmra.mxu0 %v129
    %v193 = vpop.f32.mrf.mxu0
    %v194 = vadd.f32 %v95, %v193
    %195 = vmatmul.f32.gmra.mxu0 %v132
    %v196 = vpop.f32.mrf.mxu0
    %v197 = vadd.f32 %v95, %v196
    %198 = vmatmul.f32.gmra.mxu0 %v135
    %v199 = vpop.f32.mrf.mxu0
    %v200 = vadd.f32 %v95, %v199
    %201 = vmatmul.f32.gmra.mxu0 %v138
    %v202 = vpop.f32.mrf.mxu0
    %v203 = vadd.f32 %v95, %v202
    %204 = vmatmul.f32.gmra.mxu0 %v141
    %v205 = vpop.f32.mrf.mxu0
    %v206 = vadd.f32 %v95, %v205
    %207 = vmatmul.f32.gmra.mxu0 %v144
    %v208 = vpop.f32.mrf.mxu0
    %v209 = vadd.f32 %v95, %v208
    %210 = vdwg.mxu0
    %211 = vst [vmem:[#allocation5] sm:$0xff] %v164
    %212 = vst [vmem:[#allocation5 + $0x8] sm:$0xff] %v167
    %213 = vst [vmem:[#allocation5 + $0x10] sm:$0xff] %v170
    %214 = vst [vmem:[#allocation5 + $0x18] sm:$0xff] %v173
    %215 = vst [vmem:[#allocation5 + $0x20] sm:$0xff] %v176
    %216 = vst [vmem:[#allocation5 + $0x28] sm:$0xff] %v179
    %217 = vst [vmem:[#allocation5 + $0x30] sm:$0xff] %v182
    %218 = vst [vmem:[#allocation5 + $0x38] sm:$0xff] %v185
    %219 = vst [vmem:[#allocation5 + $0x40] sm:$0xff] %v188
    %220 = vst [vmem:[#allocation5 + $0x48] sm:$0xff] %v191
    %221 = vst [vmem:[#allocation5 + $0x50] sm:$0xff] %v194
    %222 = vst [vmem:[#allocation5 + $0x58] sm:$0xff] %v197
    %223 = vst [vmem:[#allocation5 + $0x60] sm:$0xff] %v200
    %224 = vst [vmem:[#allocation5 + $0x68] sm:$0xff] %v203
    %225 = vst [vmem:[#allocation5 + $0x70] sm:$0xff] %v206
    %226 = vst [vmem:[#allocation5 + $0x78] sm:$0xff] %v209
    %v227 = vld [vmem:[%s3] sm:$0xff]
    %v228 = vld [vmem:[%s3 + $0x8] sm:$0xff]
    %v229 = vld [vmem:[%s3 + $0x10] sm:$0xff]
    %v230 = vld [vmem:[%s3 + $0x18] sm:$0xff]
    %v231 = vld [vmem:[%s3 + $0x20] sm:$0xff]
    %v232 = vld [vmem:[%s3 + $0x28] sm:$0xff]
    %v233 = vld [vmem:[%s3 + $0x30] sm:$0xff]
    %v234 = vld [vmem:[%s3 + $0x38] sm:$0xff]
    %v235 = vld [vmem:[%s3 + $0x40] sm:$0xff]
    %v236 = vld [vmem:[%s3 + $0x48] sm:$0xff]
    %v237 = vld [vmem:[%s3 + $0x50] sm:$0xff]
    %v238 = vld [vmem:[%s3 + $0x58] sm:$0xff]
    %v239 = vld [vmem:[%s3 + $0x60] sm:$0xff]
    %v240 = vld [vmem:[%s3 + $0x68] sm:$0xff]
    %v241 = vld [vmem:[%s3 + $0x70] sm:$0xff]
    %v242 = vld [vmem:[%s3 + $0x78] sm:$0xff]
    %s243 = smul.u32 0, 128
    %v244 = vstv %s243
    %v245 = vsub.s32 %v227, %v244
    %v246 = vsub.s32 %v228, %v244
    %v247 = vsub.s32 %v229, %v244
    %v248 = vsub.s32 %v230, %v244
    %v249 = vsub.s32 %v231, %v244
    %v250 = vsub.s32 %v232, %v244
    %v251 = vsub.s32 %v233, %v244
    %v252 = vsub.s32 %v234, %v244
    %v253 = vsub.s32 %v235, %v244
    %v254 = vsub.s32 %v236, %v244
    %v255 = vsub.s32 %v237, %v244
    %v256 = vsub.s32 %v238, %v244
    %v257 = vsub.s32 %v239, %v244
    %v258 = vsub.s32 %v240, %v244
    %v259 = vsub.s32 %v241, %v244
    %v260 = vsub.s32 %v242, %v244
    %261 = vmax.xlane.f32.xlu0 %v164
    %v262 = vpop.xlane.xlu0 %261
    %263 = vmax.xlane.f32.xlu0 %v167
    %v264 = vpop.xlane.xlu0 %263
    %265 = vmax.xlane.f32.xlu0 %v170
    %v266 = vpop.xlane.xlu0 %265
    %267 = vmax.xlane.f32.xlu0 %v173
    %v268 = vpop.xlane.xlu0 %267
    %269 = vmax.xlane.f32.xlu0 %v176
    %v270 = vpop.xlane.xlu0 %269
    %271 = vmax.xlane.f32.xlu0 %v179
    %v272 = vpop.xlane.xlu0 %271
    %273 = vmax.xlane.f32.xlu0 %v182
    %v274 = vpop.xlane.xlu0 %273
    %275 = vmax.xlane.f32.xlu0 %v185
    %v276 = vpop.xlane.xlu0 %275
    %277 = vmax.xlane.f32.xlu0 %v188
    %v278 = vpop.xlane.xlu0 %277
    %279 = vmax.xlane.f32.xlu0 %v191
    %v280 = vpop.xlane.xlu0 %279
    %281 = vmax.xlane.f32.xlu0 %v194
    %v282 = vpop.xlane.xlu0 %281
    %283 = vmax.xlane.f32.xlu0 %v197
    %v284 = vpop.xlane.xlu0 %283
    %285 = vmax.xlane.f32.xlu0 %v200
    %v286 = vpop.xlane.xlu0 %285
    %287 = vmax.xlane.f32.xlu0 %v203
    %v288 = vpop.xlane.xlu0 %287
    %289 = vmax.xlane.f32.xlu0 %v206
    %v290 = vpop.xlane.xlu0 %289
    %291 = vmax.xlane.f32.xlu0 %v209
    %v292 = vpop.xlane.xlu0 %291
    %v293 = vld [vmem:[#allocation2] sm:$0xff]
    %v294 = vld [vmem:[#allocation2 + $0x8] sm:$0xff]
    %v295 = vld [vmem:[#allocation2 + $0x10] sm:$0xff]
    %v296 = vld [vmem:[#allocation2 + $0x18] sm:$0xff]
    %v297 = vld [vmem:[#allocation2 + $0x20] sm:$0xff]
    %v298 = vld [vmem:[#allocation2 + $0x28] sm:$0xff]
    %v299 = vld [vmem:[#allocation2 + $0x30] sm:$0xff]
    %v300 = vld [vmem:[#allocation2 + $0x38] sm:$0xff]
    %v301 = vld [vmem:[#allocation2 + $0x40] sm:$0xff]
    %v302 = vld [vmem:[#allocation2 + $0x48] sm:$0xff]
    %v303 = vld [vmem:[#allocation2 + $0x50] sm:$0xff]
    %v304 = vld [vmem:[#allocation2 + $0x58] sm:$0xff]
    %v305 = vld [vmem:[#allocation2 + $0x60] sm:$0xff]
    %v306 = vld [vmem:[#allocation2 + $0x68] sm:$0xff]
    %v307 = vld [vmem:[#allocation2 + $0x70] sm:$0xff]
    %v308 = vld [vmem:[#allocation2 + $0x78] sm:$0xff]
    %v309 = vmax.f32 %v293, %v262
    %v310 = vmax.f32 %v294, %v264
    %v311 = vmax.f32 %v295, %v266
    %v312 = vmax.f32 %v296, %v268
    %v313 = vmax.f32 %v297, %v270
    %v314 = vmax.f32 %v298, %v272
    %v315 = vmax.f32 %v299, %v274
    %v316 = vmax.f32 %v300, %v276
    %v317 = vmax.f32 %v301, %v278
    %v318 = vmax.f32 %v302, %v280
    %v319 = vmax.f32 %v303, %v282
    %v320 = vmax.f32 %v304, %v284
    %v321 = vmax.f32 %v305, %v286
    %v322 = vmax.f32 %v306, %v288
    %v323 = vmax.f32 %v307, %v290
    %v324 = vmax.f32 %v308, %v292
    %326 = vset.pattern.permute.xlu0 0
    %327 = vperm.xlu0 %326, %v309
    %v328 = vpop.permute.xlu0 %327
    %331 = vset.pattern.permute.xlu0 0
    %332 = vperm.xlu0 %331, %v310
    %v333 = vpop.permute.xlu0 %332
    %336 = vset.pattern.permute.xlu0 0
    %337 = vperm.xlu0 %336, %v311
    %v338 = vpop.permute.xlu0 %337
    %341 = vset.pattern.permute.xlu0 0
    %342 = vperm.xlu0 %341, %v312
    %v343 = vpop.permute.xlu0 %342
    %346 = vset.pattern.permute.xlu0 0
    %347 = vperm.xlu0 %346, %v313
    %v348 = vpop.permute.xlu0 %347
    %351 = vset.pattern.permute.xlu0 0
    %352 = vperm.xlu0 %351, %v314
    %v353 = vpop.permute.xlu0 %352
    %356 = vset.pattern.permute.xlu0 0
    %357 = vperm.xlu0 %356, %v315
    %v358 = vpop.permute.xlu0 %357
    %361 = vset.pattern.permute.xlu0 0
    %362 = vperm.xlu0 %361, %v316
    %v363 = vpop.permute.xlu0 %362
    %366 = vset.pattern.permute.xlu0 0
    %367 = vperm.xlu0 %366, %v317
    %v368 = vpop.permute.xlu0 %367
    %371 = vset.pattern.permute.xlu0 0
    %372 = vperm.xlu0 %371, %v318
    %v373 = vpop.permute.xlu0 %372
    %376 = vset.pattern.permute.xlu0 0
    %377 = vperm.xlu0 %376, %v319
    %v378 = vpop.permute.xlu0 %377
    %381 = vset.pattern.permute.xlu0 0
    %382 = vperm.xlu0 %381, %v320
    %v383 = vpop.permute.xlu0 %382
    %386 = vset.pattern.permute.xlu0 0
    %387 = vperm.xlu0 %386, %v321
    %v388 = vpop.permute.xlu0 %387
    %391 = vset.pattern.permute.xlu0 0
    %392 = vperm.xlu0 %391, %v322
    %v393 = vpop.permute.xlu0 %392
    %396 = vset.pattern.permute.xlu0 0
    %397 = vperm.xlu0 %396, %v323
    %v398 = vpop.permute.xlu0 %397
    %401 = vset.pattern.permute.xlu0 0
    %402 = vperm.xlu0 %401, %v324
    %v403 = vpop.permute.xlu0 %402
    %v405 = vsub.f32 %v164, %v328
    %v406 = vsub.f32 %v167, %v333
    %v407 = vsub.f32 %v170, %v338
    %v408 = vsub.f32 %v173, %v343
    %v409 = vsub.f32 %v176, %v348
    %v410 = vsub.f32 %v179, %v353
    %v411 = vsub.f32 %v182, %v358
    %v412 = vsub.f32 %v185, %v363
    %v413 = vsub.f32 %v188, %v368
    %v414 = vsub.f32 %v191, %v373
    %v415 = vsub.f32 %v194, %v378
    %v416 = vsub.f32 %v197, %v383
    %v417 = vsub.f32 %v200, %v388
    %v418 = vsub.f32 %v203, %v393
    %v419 = vsub.f32 %v206, %v398
    %v420 = vsub.f32 %v209, %v403
    %v421 = vmul.f32 %v405, 1.442695
    %v422 = vpow.pop %v421
    %v423 = vmul.f32 %v406, 1.442695
    %v424 = vpow.pop %v423
    %v425 = vmul.f32 %v407, 1.442695
    %v426 = vpow.pop %v425
    %v427 = vmul.f32 %v408, 1.442695
    %v428 = vpow.pop %v427
    %v429 = vmul.f32 %v409, 1.442695
    %v430 = vpow.pop %v429
    %v431 = vmul.f32 %v410, 1.442695
    %v432 = vpow.pop %v431
    %v433 = vmul.f32 %v411, 1.442695
    %v434 = vpow.pop %v433
    %v435 = vmul.f32 %v412, 1.442695
    %v436 = vpow.pop %v435
    %v437 = vmul.f32 %v413, 1.442695
    %v438 = vpow.pop %v437
    %v439 = vmul.f32 %v414, 1.442695
    %v440 = vpow.pop %v439
    %v441 = vmul.f32 %v415, 1.442695
    %v442 = vpow.pop %v441
    %v443 = vmul.f32 %v416, 1.442695
    %v444 = vpow.pop %v443
    %v445 = vmul.f32 %v417, 1.442695
    %v446 = vpow.pop %v445
    %v447 = vmul.f32 %v418, 1.442695
    %v448 = vpow.pop %v447
    %v449 = vmul.f32 %v419, 1.442695
    %v450 = vpow.pop %v449
    %v451 = vmul.f32 %v420, 1.442695
    %v452 = vpow.pop %v451
    %v453 = vld [vmem:[#allocation3] sm:$0xff]
    %v454 = vld [vmem:[#allocation3 + $0x8] sm:$0xff]
    %v455 = vld [vmem:[#allocation3 + $0x10] sm:$0xff]
    %v456 = vld [vmem:[#allocation3 + $0x18] sm:$0xff]
    %v457 = vld [vmem:[#allocation3 + $0x20] sm:$0xff]
    %v458 = vld [vmem:[#allocation3 + $0x28] sm:$0xff]
    %v459 = vld [vmem:[#allocation3 + $0x30] sm:$0xff]
    %v460 = vld [vmem:[#allocation3 + $0x38] sm:$0xff]
    %v461 = vld [vmem:[#allocation3 + $0x40] sm:$0xff]
    %v462 = vld [vmem:[#allocation3 + $0x48] sm:$0xff]
    %v463 = vld [vmem:[#allocation3 + $0x50] sm:$0xff]
    %v464 = vld [vmem:[#allocation3 + $0x58] sm:$0xff]
    %v465 = vld [vmem:[#allocation3 + $0x60] sm:$0xff]
    %v466 = vld [vmem:[#allocation3 + $0x68] sm:$0xff]
    %v467 = vld [vmem:[#allocation3 + $0x70] sm:$0xff]
    %v468 = vld [vmem:[#allocation3 + $0x78] sm:$0xff]
    %v469 = vsub.f32 %v293, %v309
    %v470 = vsub.f32 %v294, %v310
    %v471 = vsub.f32 %v295, %v311
    %v472 = vsub.f32 %v296, %v312
    %v473 = vsub.f32 %v297, %v313
    %v474 = vsub.f32 %v298, %v314
    %v475 = vsub.f32 %v299, %v315
    %v476 = vsub.f32 %v300, %v316
    %v477 = vsub.f32 %v301, %v317
    %v478 = vsub.f32 %v302, %v318
    %v479 = vsub.f32 %v303, %v319
    %v480 = vsub.f32 %v304, %v320
    %v481 = vsub.f32 %v305, %v321
    %v482 = vsub.f32 %v306, %v322
    %v483 = vsub.f32 %v307, %v323
    %v484 = vsub.f32 %v308, %v324
    %v485 = vmul.f32 %v469, 1.442695
    %v486 = vpow.pop %v485
    %v487 = vmul.f32 %v470, 1.442695
    %v488 = vpow.pop %v487
    %v489 = vmul.f32 %v471, 1.442695
    %v490 = vpow.pop %v489
    %v491 = vmul.f32 %v472, 1.442695
    %v492 = vpow.pop %v491
    %v493 = vmul.f32 %v473, 1.442695
    %v494 = vpow.pop %v493
    %v495 = vmul.f32 %v474, 1.442695
    %v496 = vpow.pop %v495
    %v497 = vmul.f32 %v475, 1.442695
    %v498 = vpow.pop %v497
    %v499 = vmul.f32 %v476, 1.442695
    %v500 = vpow.pop %v499
    %v501 = vmul.f32 %v477, 1.442695
    %v502 = vpow.pop %v501
    %v503 = vmul.f32 %v478, 1.442695
    %v504 = vpow.pop %v503
    %v505 = vmul.f32 %v479, 1.442695
    %v506 = vpow.pop %v505
    %v507 = vmul.f32 %v480, 1.442695
    %v508 = vpow.pop %v507
    %v509 = vmul.f32 %v481, 1.442695
    %v510 = vpow.pop %v509
    %v511 = vmul.f32 %v482, 1.442695
    %v512 = vpow.pop %v511
    %v513 = vmul.f32 %v483, 1.442695
    %v514 = vpow.pop %v513
    %v515 = vmul.f32 %v484, 1.442695
    %v516 = vpow.pop %v515
    %v517 = vmul.f32 %v453, %v486
    %v518 = vmul.f32 %v454, %v488
    %v519 = vmul.f32 %v455, %v490
    %v520 = vmul.f32 %v456, %v492
    %v521 = vmul.f32 %v457, %v494
    %v522 = vmul.f32 %v458, %v496
    %v523 = vmul.f32 %v459, %v498
    %v524 = vmul.f32 %v460, %v500
    %v525 = vmul.f32 %v461, %v502
    %v526 = vmul.f32 %v462, %v504
    %v527 = vmul.f32 %v463, %v506
    %v528 = vmul.f32 %v464, %v508
    %v529 = vmul.f32 %v465, %v510
    %v530 = vmul.f32 %v466, %v512
    %v531 = vmul.f32 %v467, %v514
    %v532 = vmul.f32 %v468, %v516
    %533 = vadd.xlane.f32.xlu0 %v422
    %v534 = vpop.xlane.xlu0 %533
    %535 = vadd.xlane.f32.xlu0 %v424
    %v536 = vpop.xlane.xlu0 %535
    %537 = vadd.xlane.f32.xlu0 %v426
    %v538 = vpop.xlane.xlu0 %537
    %539 = vadd.xlane.f32.xlu0 %v428
    %v540 = vpop.xlane.xlu0 %539
    %541 = vadd.xlane.f32.xlu0 %v430
    %v542 = vpop.xlane.xlu0 %541
    %543 = vadd.xlane.f32.xlu0 %v432
    %v544 = vpop.xlane.xlu0 %543
    %545 = vadd.xlane.f32.xlu0 %v434
    %v546 = vpop.xlane.xlu0 %545
    %547 = vadd.xlane.f32.xlu0 %v436
    %v548 = vpop.xlane.xlu0 %547
    %549 = vadd.xlane.f32.xlu0 %v438
    %v550 = vpop.xlane.xlu0 %549
    %551 = vadd.xlane.f32.xlu0 %v440
    %v552 = vpop.xlane.xlu0 %551
    %553 = vadd.xlane.f32.xlu0 %v442
    %v554 = vpop.xlane.xlu0 %553
    %555 = vadd.xlane.f32.xlu0 %v444
    %v556 = vpop.xlane.xlu0 %555
    %557 = vadd.xlane.f32.xlu0 %v446
    %v558 = vpop.xlane.xlu0 %557
    %559 = vadd.xlane.f32.xlu0 %v448
    %v560 = vpop.xlane.xlu0 %559
    %561 = vadd.xlane.f32.xlu0 %v450
    %v562 = vpop.xlane.xlu0 %561
    %563 = vadd.xlane.f32.xlu0 %v452
    %v564 = vpop.xlane.xlu0 %563
    %v565 = vadd.f32 %v517, %v534
    %v566 = vadd.f32 %v518, %v536
    %v567 = vadd.f32 %v519, %v538
    %v568 = vadd.f32 %v520, %v540
    %v569 = vadd.f32 %v521, %v542
    %v570 = vadd.f32 %v522, %v544
    %v571 = vadd.f32 %v523, %v546
    %v572 = vadd.f32 %v524, %v548
    %v573 = vadd.f32 %v525, %v550
    %v574 = vadd.f32 %v526, %v552
    %v575 = vadd.f32 %v527, %v554
    %v576 = vadd.f32 %v528, %v556
    %v577 = vadd.f32 %v529, %v558
    %v578 = vadd.f32 %v530, %v560
    %v579 = vadd.f32 %v531, %v562
    %v580 = vadd.f32 %v532, %v564
    %vm581 = vcmask 7168
    %582 = vst.msk [vmem:[#allocation3] sm:$0xff] %vm581, %v565
    %583 = vst.msk [vmem:[#allocation3 + $0x8] sm:$0xff] %vm581, %v566
    %584 = vst.msk [vmem:[#allocation3 + $0x10] sm:$0xff] %vm581, %v567
    %585 = vst.msk [vmem:[#allocation3 + $0x18] sm:$0xff] %vm581, %v568
    %586 = vst.msk [vmem:[#allocation3 + $0x20] sm:$0xff] %vm581, %v569
    %587 = vst.msk [vmem:[#allocation3 + $0x28] sm:$0xff] %vm581, %v570
    %588 = vst.msk [vmem:[#allocation3 + $0x30] sm:$0xff] %vm581, %v571
    %589 = vst.msk [vmem:[#allocation3 + $0x38] sm:$0xff] %vm581, %v572
    %590 = vst.msk [vmem:[#allocation3 + $0x40] sm:$0xff] %vm581, %v573
    %591 = vst.msk [vmem:[#allocation3 + $0x48] sm:$0xff] %vm581, %v574
    %592 = vst.msk [vmem:[#allocation3 + $0x50] sm:$0xff] %vm581, %v575
    %593 = vst.msk [vmem:[#allocation3 + $0x58] sm:$0xff] %vm581, %v576
    %594 = vst.msk [vmem:[#allocation3 + $0x60] sm:$0xff] %vm581, %v577
    %595 = vst.msk [vmem:[#allocation3 + $0x68] sm:$0xff] %vm581, %v578
    %596 = vst.msk [vmem:[#allocation3 + $0x70] sm:$0xff] %vm581, %v579
    %597 = vst.msk [vmem:[#allocation3 + $0x78] sm:$0xff] %vm581, %v580
    %598 = vst.msk [vmem:[#allocation2] sm:$0xff] %vm581, %v309
    %599 = vst.msk [vmem:[#allocation2 + $0x8] sm:$0xff] %vm581, %v310
    %600 = vst.msk [vmem:[#allocation2 + $0x10] sm:$0xff] %vm581, %v311
    %601 = vst.msk [vmem:[#allocation2 + $0x18] sm:$0xff] %vm581, %v312
    %602 = vst.msk [vmem:[#allocation2 + $0x20] sm:$0xff] %vm581, %v313
    %603 = vst.msk [vmem:[#allocation2 + $0x28] sm:$0xff] %vm581, %v314
    %604 = vst.msk [vmem:[#allocation2 + $0x30] sm:$0xff] %vm581, %v315
    %605 = vst.msk [vmem:[#allocation2 + $0x38] sm:$0xff] %vm581, %v316
    %606 = vst.msk [vmem:[#allocation2 + $0x40] sm:$0xff] %vm581, %v317
    %607 = vst.msk [vmem:[#allocation2 + $0x48] sm:$0xff] %vm581, %v318
    %608 = vst.msk [vmem:[#allocation2 + $0x50] sm:$0xff] %vm581, %v319
    %609 = vst.msk [vmem:[#allocation2 + $0x58] sm:$0xff] %vm581, %v320
    %610 = vst.msk [vmem:[#allocation2 + $0x60] sm:$0xff] %vm581, %v321
    %611 = vst.msk [vmem:[#allocation2 + $0x68] sm:$0xff] %vm581, %v322
    %612 = vst.msk [vmem:[#allocation2 + $0x70] sm:$0xff] %vm581, %v323
    %613 = vst.msk [vmem:[#allocation2 + $0x78] sm:$0xff] %vm581, %v324
    %v614 = vlaneseq
    %v615 = vand.u32 %v614, 127
    %v616 = vld [vmem:[#allocation4] sm:$0xff]
    %v617 = vld [vmem:[#allocation4 + $0x8] sm:$0xff]
    %v618 = vld [vmem:[#allocation4 + $0x10] sm:$0xff]
    %v619 = vld [vmem:[#allocation4 + $0x18] sm:$0xff]
    %v620 = vld [vmem:[#allocation4 + $0x20] sm:$0xff]
    %v621 = vld [vmem:[#allocation4 + $0x28] sm:$0xff]
    %v622 = vld [vmem:[#allocation4 + $0x30] sm:$0xff]
    %v623 = vld [vmem:[#allocation4 + $0x38] sm:$0xff]
    %v624 = vld [vmem:[#allocation4 + $0x40] sm:$0xff]
    %v625 = vld [vmem:[#allocation4 + $0x48] sm:$0xff]
    %v626 = vld [vmem:[#allocation4 + $0x50] sm:$0xff]
    %v627 = vld [vmem:[#allocation4 + $0x58] sm:$0xff]
    %v628 = vld [vmem:[#allocation4 + $0x60] sm:$0xff]
    %v629 = vld [vmem:[#allocation4 + $0x68] sm:$0xff]
    %v630 = vld [vmem:[#allocation4 + $0x70] sm:$0xff]
    %v631 = vld [vmem:[#allocation4 + $0x78] sm:$0xff]
    %632 = vset.pattern.permute.xlu0 0
    %633 = vperm.xlu0 %632, %v245
    %v634 = vpop.permute.xlu0 %633
    %635 = vset.pattern.permute.xlu0 0
    %636 = vperm.xlu0 %635, %v246
    %v637 = vpop.permute.xlu0 %636
    %638 = vset.pattern.permute.xlu0 0
    %639 = vperm.xlu0 %638, %v247
    %v640 = vpop.permute.xlu0 %639
    %641 = vset.pattern.permute.xlu0 0
    %642 = vperm.xlu0 %641, %v248
    %v643 = vpop.permute.xlu0 %642
    %644 = vset.pattern.permute.xlu0 0
    %645 = vperm.xlu0 %644, %v249
    %v646 = vpop.permute.xlu0 %645
    %647 = vset.pattern.permute.xlu0 0
    %648 = vperm.xlu0 %647, %v250
    %v649 = vpop.permute.xlu0 %648
    %650 = vset.pattern.permute.xlu0 0
    %651 = vperm.xlu0 %650, %v251
    %v652 = vpop.permute.xlu0 %651
    %653 = vset.pattern.permute.xlu0 0
    %654 = vperm.xlu0 %653, %v252
    %v655 = vpop.permute.xlu0 %654
    %656 = vset.pattern.permute.xlu0 0
    %657 = vperm.xlu0 %656, %v253
    %v658 = vpop.permute.xlu0 %657
    %659 = vset.pattern.permute.xlu0 0
    %660 = vperm.xlu0 %659, %v254
    %v661 = vpop.permute.xlu0 %660
    %662 = vset.pattern.permute.xlu0 0
    %663 = vperm.xlu0 %662, %v255
    %v664 = vpop.permute.xlu0 %663
    %665 = vset.pattern.permute.xlu0 0
    %666 = vperm.xlu0 %665, %v256
    %v667 = vpop.permute.xlu0 %666
    %668 = vset.pattern.permute.xlu0 0
    %669 = vperm.xlu0 %668, %v257
    %v670 = vpop.permute.xlu0 %669
    %671 = vset.pattern.permute.xlu0 0
    %672 = vperm.xlu0 %671, %v258
    %v673 = vpop.permute.xlu0 %672
    %674 = vset.pattern.permute.xlu0 0
    %675 = vperm.xlu0 %674, %v259
    %v676 = vpop.permute.xlu0 %675
    %677 = vset.pattern.permute.xlu0 0
    %678 = vperm.xlu0 %677, %v260
    %v679 = vpop.permute.xlu0 %678
    %vm680 = vcmp.eq.s32.totalorder %v615, %v634
    %vm681 = vcmp.eq.s32.totalorder %v615, %v637
    %vm682 = vcmp.eq.s32.totalorder %v615, %v640
    %vm683 = vcmp.eq.s32.totalorder %v615, %v643
    %vm684 = vcmp.eq.s32.totalorder %v615, %v646
    %vm685 = vcmp.eq.s32.totalorder %v615, %v649
    %vm686 = vcmp.eq.s32.totalorder %v615, %v652
    %vm687 = vcmp.eq.s32.totalorder %v615, %v655
    %vm688 = vcmp.eq.s32.totalorder %v615, %v658
    %vm689 = vcmp.eq.s32.totalorder %v615, %v661
    %vm690 = vcmp.eq.s32.totalorder %v615, %v664
    %vm691 = vcmp.eq.s32.totalorder %v615, %v667
    %vm692 = vcmp.eq.s32.totalorder %v615, %v670
    %vm693 = vcmp.eq.s32.totalorder %v615, %v673
    %vm694 = vcmp.eq.s32.totalorder %v615, %v676
    %vm695 = vcmp.eq.s32.totalorder %v615, %v679
    %v696 = vsel %vm680, %v164, 0.0
    %v697 = vsel %vm681, %v167, 0.0
    %v698 = vsel %vm682, %v170, 0.0
    %v699 = vsel %vm683, %v173, 0.0
    %v700 = vsel %vm684, %v176, 0.0
    %v701 = vsel %vm685, %v179, 0.0
    %v702 = vsel %vm686, %v182, 0.0
    %v703 = vsel %vm687, %v185, 0.0
    %v704 = vsel %vm688, %v188, 0.0
    %v705 = vsel %vm689, %v191, 0.0
    %v706 = vsel %vm690, %v194, 0.0
    %v707 = vsel %vm691, %v197, 0.0
    %v708 = vsel %vm692, %v200, 0.0
    %v709 = vsel %vm693, %v203, 0.0
    %v710 = vsel %vm694, %v206, 0.0
    %v711 = vsel %vm695, %v209, 0.0
    %712 = vadd.xlane.f32.xlu0 %v696
    %v713 = vpop.xlane.xlu0 %712
    %714 = vadd.xlane.f32.xlu0 %v697
    %v715 = vpop.xlane.xlu0 %714
    %716 = vadd.xlane.f32.xlu0 %v698
    %v717 = vpop.xlane.xlu0 %716
    %718 = vadd.xlane.f32.xlu0 %v699
    %v719 = vpop.xlane.xlu0 %718
    %720 = vadd.xlane.f32.xlu0 %v700
    %v721 = vpop.xlane.xlu0 %720
    %722 = vadd.xlane.f32.xlu0 %v701
    %v723 = vpop.xlane.xlu0 %722
    %724 = vadd.xlane.f32.xlu0 %v702
    %v725 = vpop.xlane.xlu0 %724
    %726 = vadd.xlane.f32.xlu0 %v703
    %v727 = vpop.xlane.xlu0 %726
    %728 = vadd.xlane.f32.xlu0 %v704
    %v729 = vpop.xlane.xlu0 %728
    %730 = vadd.xlane.f32.xlu0 %v705
    %v731 = vpop.xlane.xlu0 %730
    %732 = vadd.xlane.f32.xlu0 %v706
    %v733 = vpop.xlane.xlu0 %732
    %734 = vadd.xlane.f32.xlu0 %v707
    %v735 = vpop.xlane.xlu0 %734
    %736 = vadd.xlane.f32.xlu0 %v708
    %v737 = vpop.xlane.xlu0 %736
    %738 = vadd.xlane.f32.xlu0 %v709
    %v739 = vpop.xlane.xlu0 %738
    %740 = vadd.xlane.f32.xlu0 %v710
    %v741 = vpop.xlane.xlu0 %740
    %742 = vadd.xlane.f32.xlu0 %v711
    %v743 = vpop.xlane.xlu0 %742
    %v744 = vadd.f32 %v616, %v713
    %v745 = vadd.f32 %v617, %v715
    %v746 = vadd.f32 %v618, %v717
    %v747 = vadd.f32 %v619, %v719
    %v748 = vadd.f32 %v620, %v721
    %v749 = vadd.f32 %v621, %v723
    %v750 = vadd.f32 %v622, %v725
    %v751 = vadd.f32 %v623, %v727
    %v752 = vadd.f32 %v624, %v729
    %v753 = vadd.f32 %v625, %v731
    %v754 = vadd.f32 %v626, %v733
    %v755 = vadd.f32 %v627, %v735
    %v756 = vadd.f32 %v628, %v737
    %v757 = vadd.f32 %v629, %v739
    %v758 = vadd.f32 %v630, %v741
    %v759 = vadd.f32 %v631, %v743
    %760 = vst.msk [vmem:[#allocation4] sm:$0xff] %vm581, %v744
    %761 = vst.msk [vmem:[#allocation4 + $0x8] sm:$0xff] %vm581, %v745
    %762 = vst.msk [vmem:[#allocation4 + $0x10] sm:$0xff] %vm581, %v746
    %763 = vst.msk [vmem:[#allocation4 + $0x18] sm:$0xff] %vm581, %v747
    %764 = vst.msk [vmem:[#allocation4 + $0x20] sm:$0xff] %vm581, %v748
    %765 = vst.msk [vmem:[#allocation4 + $0x28] sm:$0xff] %vm581, %v749
    %766 = vst.msk [vmem:[#allocation4 + $0x30] sm:$0xff] %vm581, %v750
    %767 = vst.msk [vmem:[#allocation4 + $0x38] sm:$0xff] %vm581, %v751
    %768 = vst.msk [vmem:[#allocation4 + $0x40] sm:$0xff] %vm581, %v752
    %769 = vst.msk [vmem:[#allocation4 + $0x48] sm:$0xff] %vm581, %v753
    %770 = vst.msk [vmem:[#allocation4 + $0x50] sm:$0xff] %vm581, %v754
    %771 = vst.msk [vmem:[#allocation4 + $0x58] sm:$0xff] %vm581, %v755
    %772 = vst.msk [vmem:[#allocation4 + $0x60] sm:$0xff] %vm581, %v756
    %773 = vst.msk [vmem:[#allocation4 + $0x68] sm:$0xff] %vm581, %v757
    %774 = vst.msk [vmem:[#allocation4 + $0x70] sm:$0xff] %vm581, %v758
    %775 = vst.msk [vmem:[#allocation4 + $0x78] sm:$0xff] %vm581, %v759
    // Predicated region
    $region22: #{tpu_custom_call.1} parent=1 // pred_check
      %p776 = pneg %p20
    $region23: #{tpu_custom_call.1} parent=1 // pred_check_branch
      %778 = sbr.rel (%p776) target = $region25
    $region24: #{tpu_custom_call.1} parent=1 // pred_region
      %v779 = vld [vmem:[#allocation2] sm:$0xff]
      %v780 = vld [vmem:[#allocation2 + $0x8] sm:$0xff]
      %v781 = vld [vmem:[#allocation2 + $0x10] sm:$0xff]
      %v782 = vld [vmem:[#allocation2 + $0x18] sm:$0xff]
      %v783 = vld [vmem:[#allocation2 + $0x20] sm:$0xff]
      %v784 = vld [vmem:[#allocation2 + $0x28] sm:$0xff]
      %v785 = vld [vmem:[#allocation2 + $0x30] sm:$0xff]
      %v786 = vld [vmem:[#allocation2 + $0x38] sm:$0xff]
      %v787 = vld [vmem:[#allocation2 + $0x40] sm:$0xff]
      %v788 = vld [vmem:[#allocation2 + $0x48] sm:$0xff]
      %v789 = vld [vmem:[#allocation2 + $0x50] sm:$0xff]
      %v790 = vld [vmem:[#allocation2 + $0x58] sm:$0xff]
      %v791 = vld [vmem:[#allocation2 + $0x60] sm:$0xff]
      %v792 = vld [vmem:[#allocation2 + $0x68] sm:$0xff]
      %v793 = vld [vmem:[#allocation2 + $0x70] sm:$0xff]
      %v794 = vld [vmem:[#allocation2 + $0x78] sm:$0xff]
      %v795 = vld [vmem:[#allocation3] sm:$0xff]
      %v796 = vld [vmem:[#allocation3 + $0x8] sm:$0xff]
      %v797 = vld [vmem:[#allocation3 + $0x10] sm:$0xff]
      %v798 = vld [vmem:[#allocation3 + $0x18] sm:$0xff]
      %v799 = vld [vmem:[#allocation3 + $0x20] sm:$0xff]
      %v800 = vld [vmem:[#allocation3 + $0x28] sm:$0xff]
      %v801 = vld [vmem:[#allocation3 + $0x30] sm:$0xff]
      %v802 = vld [vmem:[#allocation3 + $0x38] sm:$0xff]
      %v803 = vld [vmem:[#allocation3 + $0x40] sm:$0xff]
      %v804 = vld [vmem:[#allocation3 + $0x48] sm:$0xff]
      %v805 = vld [vmem:[#allocation3 + $0x50] sm:$0xff]
      %v806 = vld [vmem:[#allocation3 + $0x58] sm:$0xff]
      %v807 = vld [vmem:[#allocation3 + $0x60] sm:$0xff]
      %v808 = vld [vmem:[#allocation3 + $0x68] sm:$0xff]
      %v809 = vld [vmem:[#allocation3 + $0x70] sm:$0xff]
      %v810 = vld [vmem:[#allocation3 + $0x78] sm:$0xff]
      %v811 = vlog2.pop %v795
      %v812 = vmul.f32 %v811, 0.6931472
      %v813 = vlog2.pop %v796
      %v814 = vmul.f32 %v813, 0.6931472
      %v815 = vlog2.pop %v797
      %v816 = vmul.f32 %v815, 0.6931472
      %v817 = vlog2.pop %v798
      %v818 = vmul.f32 %v817, 0.6931472
      %v819 = vlog2.pop %v799
      %v820 = vmul.f32 %v819, 0.6931472
      %v821 = vlog2.pop %v800
      %v822 = vmul.f32 %v821, 0.6931472
      %v823 = vlog2.pop %v801
      %v824 = vmul.f32 %v823, 0.6931472
      %v825 = vlog2.pop %v802
      %v826 = vmul.f32 %v825, 0.6931472
      %v827 = vlog2.pop %v803
      %v828 = vmul.f32 %v827, 0.6931472
      %v829 = vlog2.pop %v804
      %v830 = vmul.f32 %v829, 0.6931472
      %v831 = vlog2.pop %v805
      %v832 = vmul.f32 %v831, 0.6931472
      %v833 = vlog2.pop %v806
      %v834 = vmul.f32 %v833, 0.6931472
      %v835 = vlog2.pop %v807
      %v836 = vmul.f32 %v835, 0.6931472
      %v837 = vlog2.pop %v808
      %v838 = vmul.f32 %v837, 0.6931472
      %v839 = vlog2.pop %v809
      %v840 = vmul.f32 %v839, 0.6931472
      %v841 = vlog2.pop %v810
      %v842 = vmul.f32 %v841, 0.6931472
      %v843 = vadd.f32 %v779, %v812
      %v844 = vadd.f32 %v780, %v814
      %v845 = vadd.f32 %v781, %v816
      %v846 = vadd.f32 %v782, %v818
      %v847 = vadd.f32 %v783, %v820
      %v848 = vadd.f32 %v784, %v822
      %v849 = vadd.f32 %v785, %v824
      %v850 = vadd.f32 %v786, %v826
      %v851 = vadd.f32 %v787, %v828
      %v852 = vadd.f32 %v788, %v830
      %v853 = vadd.f32 %v789, %v832
      %v854 = vadd.f32 %v790, %v834
      %v855 = vadd.f32 %v791, %v836
      %v856 = vadd.f32 %v792, %v838
      %v857 = vadd.f32 %v793, %v840
      %v858 = vadd.f32 %v794, %v842
      %vm859 = vcmp.ge.s32.totalorder %v227, 0
      %vm860 = vcmp.ge.s32.totalorder %v228, 0
      %vm861 = vcmp.ge.s32.totalorder %v229, 0
      %vm862 = vcmp.ge.s32.totalorder %v230, 0
      %vm863 = vcmp.ge.s32.totalorder %v231, 0
      %vm864 = vcmp.ge.s32.totalorder %v232, 0
      %vm865 = vcmp.ge.s32.totalorder %v233, 0
      %vm866 = vcmp.ge.s32.totalorder %v234, 0
      %vm867 = vcmp.ge.s32.totalorder %v235, 0
      %vm868 = vcmp.ge.s32.totalorder %v236, 0
      %vm869 = vcmp.ge.s32.totalorder %v237, 0
      %vm870 = vcmp.ge.s32.totalorder %v238, 0
      %vm871 = vcmp.ge.s32.totalorder %v239, 0
      %vm872 = vcmp.ge.s32.totalorder %v240, 0
      %vm873 = vcmp.ge.s32.totalorder %v241, 0
      %vm874 = vcmp.ge.s32.totalorder %v242, 0
      %v875 = vld [vmem:[#allocation4] sm:$0xff]
      %v876 = vld [vmem:[#allocation4 + $0x8] sm:$0xff]
      %v877 = vld [vmem:[#allocation4 + $0x10] sm:$0xff]
      %v878 = vld [vmem:[#allocation4 + $0x18] sm:$0xff]
      %v879 = vld [vmem:[#allocation4 + $0x20] sm:$0xff]
      %v880 = vld [vmem:[#allocation4 + $0x28] sm:$0xff]
      %v881 = vld [vmem:[#allocation4 + $0x30] sm:$0xff]
      %v882 = vld [vmem:[#allocation4 + $0x38] sm:$0xff]
      %v883 = vld [vmem:[#allocation4 + $0x40] sm:$0xff]
      %v884 = vld [vmem:[#allocation4 + $0x48] sm:$0xff]
      %v885 = vld [vmem:[#allocation4 + $0x50] sm:$0xff]
      %v886 = vld [vmem:[#allocation4 + $0x58] sm:$0xff]
      %v887 = vld [vmem:[#allocation4 + $0x60] sm:$0xff]
      %v888 = vld [vmem:[#allocation4 + $0x68] sm:$0xff]
      %v889 = vld [vmem:[#allocation4 + $0x70] sm:$0xff]
      %v890 = vld [vmem:[#allocation4 + $0x78] sm:$0xff]
      %v891 = vsub.f32 %v843, %v875
      %v892 = vsub.f32 %v844, %v876
      %v893 = vsub.f32 %v845, %v877
      %v894 = vsub.f32 %v846, %v878
      %v895 = vsub.f32 %v847, %v879
      %v896 = vsub.f32 %v848, %v880
      %v897 = vsub.f32 %v849, %v881
      %v898 = vsub.f32 %v850, %v882
      %v899 = vsub.f32 %v851, %v883
      %v900 = vsub.f32 %v852, %v884
      %v901 = vsub.f32 %v853, %v885
      %v902 = vsub.f32 %v854, %v886
      %v903 = vsub.f32 %v855, %v887
      %v904 = vsub.f32 %v856, %v888
      %v905 = vsub.f32 %v857, %v889
      %v906 = vsub.f32 %v858, %v890
      %v907 = vsel %vm859, %v891, 0.0
      %v908 = vsel %vm860, %v892, 0.0
      %v909 = vsel %vm861, %v893, 0.0
      %v910 = vsel %vm862, %v894, 0.0
      %v911 = vsel %vm863, %v895, 0.0
      %v912 = vsel %vm864, %v896, 0.0
      %v913 = vsel %vm865, %v897, 0.0
      %v914 = vsel %vm866, %v898, 0.0
      %v915 = vsel %vm867, %v899, 0.0
      %v916 = vsel %vm868, %v900, 0.0
      %v917 = vsel %vm869, %v901, 0.0
      %v918 = vsel %vm870, %v902, 0.0
      %v919 = vsel %vm871, %v903, 0.0
      %v920 = vsel %vm872, %v904, 0.0
      %v921 = vsel %vm873, %v905, 0.0
      %v922 = vsel %vm874, %v906, 0.0
      %923 = vst.msk [vmem:[%s5] sm:$0xff] %vm581, %v907
      %924 = vst.msk [vmem:[%s5 + $0x8] sm:$0xff] %vm581, %v908
      %925 = vst.msk [vmem:[%s5 + $0x10] sm:$0xff] %vm581, %v909
      %926 = vst.msk [vmem:[%s5 + $0x18] sm:$0xff] %vm581, %v910
      %927 = vst.msk [vmem:[%s5 + $0x20] sm:$0xff] %vm581, %v911
      %928 = vst.msk [vmem:[%s5 + $0x28] sm:$0xff] %vm581, %v912
      %929 = vst.msk [vmem:[%s5 + $0x30] sm:$0xff] %vm581, %v913
      %930 = vst.msk [vmem:[%s5 + $0x38] sm:$0xff] %vm581, %v914
      %931 = vst.msk [vmem:[%s5 + $0x40] sm:$0xff] %vm581, %v915
      %932 = vst.msk [vmem:[%s5 + $0x48] sm:$0xff] %vm581, %v916
      %933 = vst.msk [vmem:[%s5 + $0x50] sm:$0xff] %vm581, %v917
      %934 = vst.msk [vmem:[%s5 + $0x58] sm:$0xff] %vm581, %v918
      %935 = vst.msk [vmem:[%s5 + $0x60] sm:$0xff] %vm581, %v919
      %936 = vst.msk [vmem:[%s5 + $0x68] sm:$0xff] %vm581, %v920
      %937 = vst.msk [vmem:[%s5 + $0x70] sm:$0xff] %vm581, %v921
      %938 = vst.msk [vmem:[%s5 + $0x78] sm:$0xff] %vm581, %v922
    $region25: #{tpu_custom_call.1} parent=1 // pred_fallthru
      _
    // Predicated region
    $region26: #{tpu_custom_call.1} parent=1 // pred_check
      _
    $region27: #{tpu_custom_call.1} parent=1 // pred_check_branch
      %940 = sbr.rel (0) target = $region29
    $region28: #{tpu_custom_call.1} parent=1 // pred_region
      %942 = vsyncadd [#allocation6], 0
      %s943 = sshll.u32 [#allocation5], 4
      %s944 = int_to_ptr.vmem [resolvable:$true] %s943
      %s945 = sshll.u32 %s4, 4
      %s946 = int_to_ptr.hbm [resolvable:$true] %s945
      %951 = dma.vmem_to_hbm [thread:$0]  %s944, 2048, %s946, [#allocation6], 128, 128, 8
    $region29: #{tpu_custom_call.1} parent=1 // pred_fallthru
      _
    // Predicated region
    $region30: #{tpu_custom_call.1} parent=1 // pred_check
      _
    $region31: #{tpu_custom_call.1} parent=1 // pred_check_branch
      %953 = sbr.rel (0) target = $region33
    $region32: #{tpu_custom_call.1} parent=1 // pred_region
      _
    $region33: #{tpu_custom_call.1} parent=1 // pred_fallthru
      _
    // Predicated region
    $region34: #{tpu_custom_call.1} parent=1 // pred_check
      _
    $region35: #{tpu_custom_call.1} parent=1 // pred_check_branch
      %955 = sbr.rel (0) target = $region37
    $region36: #{tpu_custom_call.1} parent=1 // pred_region
      %957 = dma.done [#allocation6], 2048
    $region37: #{tpu_custom_call.1} parent=1 // pred_fallthru
      _
    // Predicated region
    $region38: #{tpu_custom_call.1} parent=1 // pred_check
      _
    $region39: #{tpu_custom_call.1} parent=1 // pred_check_branch
      %959 = sbr.rel (0) target = $region41
    $region40: #{tpu_custom_call.1} parent=1 // pred_region
      _
    $region41: #{tpu_custom_call.1} parent=1 // pred_fallthru
      _
    %960 = vsyncpa [#allocation6], 1

</llo_original>
